<compile_context>
chip_gen: v7x
topology: tpu7x:2x2x1
jax: 0.10.0
libtpu: 0.0.40
codegen_flags: <defaults>
</compile_context>

<pallas_src>
import jax
import jax.numpy as jnp
from jax.experimental import pallas as pl
from jax.experimental.pallas import tpu as pltpu

_LANE = 128
_VMEM_LIMIT = 32 * 1024 * 1024  # explicit scoped-VMEM budget, safe on v5e/v6e/v7x


def _round_up(x, m):
    return ((x + m - 1) // m) * m


def _pick_tile(dim, pref, align):
    """Largest divisor of `dim` that is a multiple of `align` and <= `pref`.

    Small dims (<= pref) use the full extent (always legal under the (8,128)
    block rule).  Dims with no aligned divisor fall back to the full extent
    rather than an illegal/masked tile.
    """
    if dim <= pref:
        return dim
    t = (pref // align) * align
    while t >= align:
        if dim % t == 0:
            return t
        t -= align
    return dim  # no aligned divisor; full extent (legal, pipelining lost)


# ---------------------------------------------------------------------------
# Kernel 1: fold the ensemble over teachers into the parameters.
#   W_comb = sum_t ens_w[t] * W_t   (D, C)
#   b_comb = sum_t ens_w[t] * b_t   (1, C)
# Grid = (D tiles, C tiles, T); the teacher axis is the innermost "arbitrary"
# reduction axis.  Accumulation happens in an f32 VMEM scratch; the (possibly
# bf16) outputs are written once at t == T-1, so reduced-precision outputs
# never lose accumulation accuracy.
# ---------------------------------------------------------------------------
def _combine_kernel(ens_w_ref,      # SMEM scalar-prefetch: (T,) f32
                    w_ref,          # VMEM: (tD, tC)  teacher t's weight tile
                    b_ref,          # VMEM: (1, tC)   teacher t's bias tile
                    wc_ref,         # VMEM out: (tD, tC) combined weight (compute dtype)
                    bc_ref,         # VMEM out: (1, tC)  combined bias   (compute dtype)
                    wacc_ref,       # VMEM scratch: (tD, tC) f32 accumulator
                    bacc_ref):      # VMEM scratch: (1, tC)  f32 accumulator
    t = pl.program_id(2)

    @pl.when(t == 0)
    def _():
        wacc_ref[...] = jnp.zeros_like(wacc_ref)
        bacc_ref[...] = jnp.zeros_like(bacc_ref)

    wt = ens_w_ref[t]
    wacc_ref[...] += wt * w_ref[...].astype(jnp.float32)
    bacc_ref[...] += wt * b_ref[...].astype(jnp.float32)

    @pl.when(t == pl.num_programs(2) - 1)
    def _():
        wc_ref[...] = wacc_ref[...].astype(wc_ref.dtype)
        bc_ref[...] = bacc_ref[...].astype(bc_ref.dtype)


def combine_teachers(teacher_ws, teacher_bs, ens_weights, *,
                     out_dtype=jnp.bfloat16, td_pref=512, tc_pref=512):
    """teacher_ws: (T, D, C); teacher_bs: (T, 1, C); ens_weights: (T,) f32.
    Returns (W_comb (D, C), b_comb (1, C)) in `out_dtype`."""
    T, D, C = teacher_ws.shape
    td = _pick_tile(D, td_pref, 8)
    tc = _pick_tile(C, tc_pref, _LANE)
    grid = (D // td, C // tc, T)             # reduction (teacher) axis last

    grid_spec = pltpu.PrefetchScalarGridSpec(
        num_scalar_prefetch=1,               # ens_weights -> SMEM
        grid=grid,
        in_specs=[
            pl.BlockSpec((pl.Squeezed(), td, tc), lambda i, j, t, ew: (t, i, j)),
            pl.BlockSpec((pl.Squeezed(), 1, tc), lambda i, j, t, ew: (t, 0, j)),
        ],
        out_specs=[
            pl.BlockSpec((td, tc), lambda i, j, t, ew: (i, j)),
            pl.BlockSpec((1, tc), lambda i, j, t, ew: (0, j)),
        ],
        scratch_shapes=[
            pltpu.VMEM((td, tc), jnp.float32),
            pltpu.VMEM((1, tc), jnp.float32),
        ],
    )
    return pl.pallas_call(
        _combine_kernel,
        out_shape=(jax.ShapeDtypeStruct((D, C), out_dtype),
                   jax.ShapeDtypeStruct((1, C), out_dtype)),
        grid_spec=grid_spec,
        compiler_params=pltpu.CompilerParams(
            dimension_semantics=("parallel", "parallel", "arbitrary"),
            vmem_limit_bytes=_VMEM_LIMIT),
    )(ens_weights, teacher_ws, teacher_bs)


# ---------------------------------------------------------------------------
# Kernel 2: single tiled matmul + bias,  out = x @ W_comb + b_comb.
# Grid = (M tiles, N tiles, K tiles); K is the "arbitrary" reduction axis and
# the f32 output tile is the accumulator (no scratch, no final copy).
# ---------------------------------------------------------------------------
def _linear_kernel(x_ref,           # VMEM: (tM, tK) compute dtype
                   w_ref,           # VMEM: (tK, tN) compute dtype
                   b_ref,           # VMEM: (1, tN)  compute dtype
                   o_ref):          # VMEM out: (tM, tN) f32, accumulator
    k = pl.program_id(2)

    @pl.when(k == 0)
    def _():
        o_ref[...] = jnp.broadcast_to(b_ref[...].astype(jnp.float32), o_ref.shape)

    o_ref[...] += jnp.dot(x_ref[...], w_ref[...],
                          preferred_element_type=jnp.float32)


def linear_forward(x, w, b, *, tm_pref=512, tn_pref=512, tk_pref=1024):
    """x: (B, D); w: (D, C); b: (1, C). Returns (B, C) float32."""
    B, D = x.shape
    _, C = w.shape
    tm = _pick_tile(B, tm_pref, 8)
    tn = _pick_tile(C, tn_pref, _LANE)
    tk = _pick_tile(D, tk_pref, _LANE)
    grid = (B // tm, C // tn, D // tk)

    grid_spec = pltpu.PrefetchScalarGridSpec(
        num_scalar_prefetch=0,
        grid=grid,
        in_specs=[
            pl.BlockSpec((tm, tk), lambda i, j, k: (i, k)),   # x tile
            pl.BlockSpec((tk, tn), lambda i, j, k: (k, j)),   # W tile
            pl.BlockSpec((1, tn), lambda i, j, k: (0, j)),    # bias tile
        ],
        out_specs=pl.BlockSpec((tm, tn), lambda i, j, k: (i, j)),
    )
    return pl.pallas_call(
        _linear_kernel,
        out_shape=jax.ShapeDtypeStruct((B, C), jnp.float32),
        grid_spec=grid_spec,
        compiler_params=pltpu.CompilerParams(
            # two parallel axes -> megacore sharding; K is the reduction
            dimension_semantics=("parallel", "parallel", "arbitrary"),
            vmem_limit_bytes=_VMEM_LIMIT),
    )(x, w, b)


def ensemble_teacher_forward(x, teacher_ws, teacher_bs, ens_weights,
                             *, compute_dtype=jnp.bfloat16):
    """Full EnsembleTeacher.forward with linear teachers.

    compute_dtype sets the MXU operand dtype (bf16 default — the right choice
    on v5e/v6e/v7x; accumulation is always f32 and the output is f32).
    Pass jnp.float32 for bit-faithful f32 semantics.
    """
    T, D, C = teacher_ws.shape

    # Lane-dense I/O: if C is not a lane multiple, zero-pad the class dim so
    # kernel stores are unmasked full-lane `vst`; slice back at the end.
    Cp = _round_up(C, _LANE)
    if Cp != C:
        pad = Cp - C
        teacher_ws = jnp.pad(teacher_ws, ((0, 0), (0, 0), (0, pad)))
        teacher_bs = jnp.pad(teacher_bs, ((0, 0), (0, 0), (0, pad)))

    # Fold the ensemble into the parameters once; emit them directly in the
    # compute dtype (no wrapper-side astype -> no extra D*C HBM round trip).
    w_comb, b_comb = combine_teachers(
        teacher_ws, teacher_bs, ens_weights.astype(jnp.float32),
        out_dtype=compute_dtype)

    tk_pref = 1024 if jnp.dtype(compute_dtype).itemsize <= 2 else 512
    out = linear_forward(x.astype(compute_dtype), w_comb, b_comb,
                         tk_pref=tk_pref)
    if Cp != C:
        out = out[:, :C]
    return out


def _reference(x, teacher_ws, teacher_bs, ens_weights):
    # mirrors EnsembleTeacher.forward with linear teachers
    all_logits = jnp.einsum("bd,tdc->tbc",
                            x.astype(jnp.float32),
                            teacher_ws.astype(jnp.float32)) \
                 + teacher_bs.astype(jnp.float32)              # (T, B, C)
    return (all_logits * ens_weights[:, None, None]).sum(axis=0)


if __name__ == "__main__":
    # small, deterministic setup
    T, B, D, C = 3, 8, 32, 16

    key = jax.random.PRNGKey(0)
    kx, kw, kb = jax.random.split(key, 3)

    x = jax.random.normal(kx, (B, D), dtype=jnp.float32)
    # deterministic synthetic "teacher" parameters (no checkpoint loading)
    teacher_ws = 0.1 * jax.random.normal(kw, (T, D, C), dtype=jnp.float32)
    teacher_bs = 0.1 * jax.random.normal(kb, (T, 1, C), dtype=jnp.float32)

    # un-normalized ensemble weights, normalized exactly like the module does
    raw_weights = jnp.array([1.0, 2.0, 3.0], dtype=jnp.float32)
    ens_weights = raw_weights / raw_weights.sum()

    ref = _reference(x, teacher_ws, teacher_bs, ens_weights)

    # default path: bf16 MXU operands, f32 accumulate (recommended on all gens)
    out_bf16 = ensemble_teacher_forward(x, teacher_ws, teacher_bs, ens_weights)
    out_bf16 = jax.block_until_ready(out_bf16)
    assert out_bf16.shape == (B, C)
    assert jnp.allclose(out_bf16, ref, atol=5e-2, rtol=5e-2), "bf16 mismatch vs reference"

    # f32 operand path (bit-faithful module semantics)
    out_f32 = ensemble_teacher_forward(x, teacher_ws, teacher_bs, ens_weights,
                                       compute_dtype=jnp.float32)
    out_f32 = jax.block_until_ready(out_f32)
    assert jnp.allclose(out_f32, ref, atol=1e-5, rtol=1e-5), "f32 mismatch vs reference"

    # bf16-stored teacher params (halves combine-kernel HBM reads; f32 accumulate)
    out_bf16_w = ensemble_teacher_forward(x,
                                          teacher_ws.astype(jnp.bfloat16),
                                          teacher_bs.astype(jnp.bfloat16),
                                          ens_weights)
    out_bf16_w = jax.block_until_ready(out_bf16_w)
    assert jnp.allclose(out_bf16_w, ref, atol=5e-2, rtol=5e-2), "bf16-weights mismatch"

    print("KERNEL_OK")
</pallas_src>

<mosaic_0001>
module attributes {stable_mosaic.version = 11 : i64} {
  func.func @_combine_kernel(%arg0: i32, %arg1: i32, %arg2: i32, %arg3: memref<3xf32, #tpu.memory_space<smem>>, %arg4: memref<1x32x128xf32, #tpu.memory_space<vmem>>, %arg5: memref<1x1x128xf32, #tpu.memory_space<vmem>>, %arg6: memref<32x128xbf16, #tpu.memory_space<vmem>>, %arg7: memref<1x128xbf16, #tpu.memory_space<vmem>>, %arg8: memref<32x128xf32, #tpu.memory_space<vmem>>, %arg9: memref<1x128xf32, #tpu.memory_space<vmem>>) attributes {dimension_semantics = [#tpu.dimension_semantics<parallel>, #tpu.dimension_semantics<parallel>, #tpu.dimension_semantics<arbitrary>], iteration_bounds = array<i64: 1, 1, 3>, scalar_prefetch = 1 : i64, scratch_operands = 2 : i64, tpu.core_type = #tpu.core_type<tc>, window_params = [{transform_indices = @transform_0, window_bounds = array<i64: 1, 32, 128>}, {transform_indices = @transform_1, window_bounds = array<i64: 1, 1, 128>}, {transform_indices = @transform_2, window_bounds = array<i64: 32, 128>}, {transform_indices = @transform_3, window_bounds = array<i64: 1, 128>}]} {
    %c0_i32 = arith.constant 0 : i32
    %0 = arith.cmpi eq, %arg2, %c0_i32 : i32
    %1 = arith.extui %0 : i1 to i32
    %c0_i32_0 = arith.constant 0 : i32
    %2 = arith.cmpi ne, %1, %c0_i32_0 : i32
    scf.if %2 {
      %cst = arith.constant 0.000000e+00 : f32
      %22 = vector.broadcast %cst : f32 to vector<32x128xf32>
      %c0_15 = arith.constant 0 : index
      %c0_16 = arith.constant 0 : index
      %23 = vector.load %arg8[%c0_15, %c0_16] : memref<32x128xf32, #tpu.memory_space<vmem>>, vector<32x128xf32>
      tpu.vector_store %arg8[%c0_15, %c0_16], %22 {strides = array<i32>} : memref<32x128xf32, #tpu.memory_space<vmem>>, vector<32x128xf32>,
      %cst_17 = arith.constant 0.000000e+00 : f32
      %24 = vector.broadcast %cst_17 : f32 to vector<1x128xf32>
      %c0_18 = arith.constant 0 : index
      %c0_19 = arith.constant 0 : index
      %25 = vector.load %arg9[%c0_18, %c0_19] : memref<1x128xf32, #tpu.memory_space<vmem>>, vector<1x128xf32>
      tpu.vector_store %arg9[%c0_18, %c0_19], %24 {strides = array<i32>} : memref<1x128xf32, #tpu.memory_space<vmem>>, vector<1x128xf32>,
    } else {
    }
    %3 = arith.index_cast %arg2 : i32 to index
    %4 = memref.load %arg3[%3] : memref<3xf32, #tpu.memory_space<smem>>
    %c0 = arith.constant 0 : index
    %c0_1 = arith.constant 0 : index
    %5 = vector.load %arg8[%c0, %c0_1] : memref<32x128xf32, #tpu.memory_space<vmem>>, vector<32x128xf32>
    %c0_2 = arith.constant 0 : index
    %c0_3 = arith.constant 0 : index
    %c0_4 = arith.constant 0 : index
    %6 = vector.load %arg4[%c0_2, %c0_3, %c0_4] : memref<1x32x128xf32, #tpu.memory_space<vmem>>, vector<1x32x128xf32>
    %7 = vector.shape_cast %6 : vector<1x32x128xf32> to vector<32x128xf32>
    %8 = vector.broadcast %4 : f32 to vector<32x128xf32>
    %9 = arith.mulf %8, %7 : vector<32x128xf32>
    %10 = arith.addf %5, %9 : vector<32x128xf32>
    %c0_5 = arith.constant 0 : index
    %c0_6 = arith.constant 0 : index
    %11 = vector.load %arg8[%c0_5, %c0_6] : memref<32x128xf32, #tpu.memory_space<vmem>>, vector<32x128xf32>
    tpu.vector_store %arg8[%c0_5, %c0_6], %10 {strides = array<i32>} : memref<32x128xf32, #tpu.memory_space<vmem>>, vector<32x128xf32>,
    %c0_7 = arith.constant 0 : index
    %c0_8 = arith.constant 0 : index
    %12 = vector.load %arg9[%c0_7, %c0_8] : memref<1x128xf32, #tpu.memory_space<vmem>>, vector<1x128xf32>
    %c0_9 = arith.constant 0 : index
    %c0_10 = arith.constant 0 : index
    %c0_11 = arith.constant 0 : index
    %13 = vector.load %arg5[%c0_9, %c0_10, %c0_11] : memref<1x1x128xf32, #tpu.memory_space<vmem>>, vector<1x1x128xf32>
    %14 = vector.shape_cast %13 : vector<1x1x128xf32> to vector<1x128xf32>
    %15 = vector.broadcast %4 : f32 to vector<1x128xf32>
    %16 = arith.mulf %15, %14 : vector<1x128xf32>
    %17 = arith.addf %12, %16 : vector<1x128xf32>
    %c0_12 = arith.constant 0 : index
    %c0_13 = arith.constant 0 : index
    %18 = vector.load %arg9[%c0_12, %c0_13] : memref<1x128xf32, #tpu.memory_space<vmem>>, vector<1x128xf32>
    tpu.vector_store %arg9[%c0_12, %c0_13], %17 {strides = array<i32>} : memref<1x128xf32, #tpu.memory_space<vmem>>, vector<1x128xf32>,
    %c2_i32 = arith.constant 2 : i32
    %19 = arith.cmpi eq, %arg2, %c2_i32 : i32
    %20 = arith.extui %19 : i1 to i32
    %c0_i32_14 = arith.constant 0 : i32
    %21 = arith.cmpi ne, %20, %c0_i32_14 : i32
    scf.if %21 {
      %c0_15 = arith.constant 0 : index
      %c0_16 = arith.constant 0 : index
      %22 = vector.load %arg8[%c0_15, %c0_16] : memref<32x128xf32, #tpu.memory_space<vmem>>, vector<32x128xf32>
      %23 = arith.truncf %22 : vector<32x128xf32> to vector<32x128xbf16>
      %c0_17 = arith.constant 0 : index
      %c0_18 = arith.constant 0 : index
      %24 = vector.load %arg6[%c0_17, %c0_18] : memref<32x128xbf16, #tpu.memory_space<vmem>>, vector<32x128xbf16>
      tpu.vector_store %arg6[%c0_17, %c0_18], %23 {strides = array<i32>} : memref<32x128xbf16, #tpu.memory_space<vmem>>, vector<32x128xbf16>,
      %c0_19 = arith.constant 0 : index
      %c0_20 = arith.constant 0 : index
      %25 = vector.load %arg9[%c0_19, %c0_20] : memref<1x128xf32, #tpu.memory_space<vmem>>, vector<1x128xf32>
      %26 = arith.truncf %25 : vector<1x128xf32> to vector<1x128xbf16>
      %c0_21 = arith.constant 0 : index
      %c0_22 = arith.constant 0 : index
      %27 = vector.load %arg7[%c0_21, %c0_22] : memref<1x128xbf16, #tpu.memory_space<vmem>>, vector<1x128xbf16>
      tpu.vector_store %arg7[%c0_21, %c0_22], %26 {strides = array<i32>} : memref<1x128xbf16, #tpu.memory_space<vmem>>, vector<1x128xbf16>,
    } else {
    }
    return
  }
  func.func @transform_0(%arg0: i32, %arg1: i32, %arg2: i32, %arg3: memref<3xf32, #tpu.memory_space<smem>>) -> (i32, i32, i32) {
    %c0_i32 = arith.constant 0 : i32
    return %arg2, %arg0, %arg1 : i32, i32, i32
  }
  func.func @transform_1(%arg0: i32, %arg1: i32, %arg2: i32, %arg3: memref<3xf32, #tpu.memory_space<smem>>) -> (i32, i32, i32) {
    %c0_i32 = arith.constant 0 : i32
    %c0_i32_0 = arith.constant 0 : i32
    return %arg2, %c0_i32, %arg1 : i32, i32, i32
  }
  func.func @transform_2(%arg0: i32, %arg1: i32, %arg2: i32, %arg3: memref<3xf32, #tpu.memory_space<smem>>) -> (i32, i32) {
    %c0_i32 = arith.constant 0 : i32
    return %arg0, %arg1 : i32, i32
  }
  func.func @transform_3(%arg0: i32, %arg1: i32, %arg2: i32, %arg3: memref<3xf32, #tpu.memory_space<smem>>) -> (i32, i32) {
    %c0_i32 = arith.constant 0 : i32
    %c0_i32_0 = arith.constant 0 : i32
    return %c0_i32, %arg1 : i32, i32
  }
}

</mosaic_0001>

<llo_original>
// kernel: tpu_custom_call.1
$region0: #{tpu_custom_call.1}
  #allocation0 [shape = 'u32[]', space=smem, size = 0x4, offset = 0x4, fixed_abs, tag = 'smem constant byte address 0x4 - core index']
  #allocation1 [shape = 'u32[144,128]{1,0:T(1,128)}', space=vmem, size = 0x12000, scoped, tag = 'internal scratch']
  #allocation2 [shape = 'f32[32,128]{1,0:T(8,128)}', space=vmem, size = 0x4000, scoped, tag = 'scratch operand']
  #allocation3 [shape = 'f32[1,128]{1,0:T(1,128)}', space=vmem, size = 0x200, scoped, tag = 'scratch operand']
  #allocation4 [shape = 's32[1]{0}', space=sflag, size = 0x4, scoped, tag = 'scoped memory for tpu_custom_call.1']
  #allocation5 [shape = 'u8[512]{0}', space=smem, size = 0x200, scoped, tag = 'prefetched SMEM operand 0']
  %s0 = inlined_call_operand.hbm [shape: f32[3], index: 0, kind: input, shape index: {}]
  %s1 = inlined_call_operand.hbm [shape: f32[3,32,128], index: 1, kind: input, shape index: {}]
  %s2 = inlined_call_operand.vmem [shape: f32[3,1,128], index: 2, kind: input, shape index: {}]
  %s3 = inlined_call_operand.hbm [shape: bf16[32,128], index: 3, kind: output, shape index: {0}]
  %s4 = inlined_call_operand.hbm [shape: bf16[1,128], index: 4, kind: output, shape index: {1}]
  %5 = xla_tuple %s3, %s4
  %s6 = sld [smem:[#allocation0]]
  $region61: #{tpu_custom_call.1} parent=0
    _
  %s8 = ssub.s32 1, %s6
  %s9 = scalar_select 0, %s8, %s6
  %11 = dma.hbm_to_smem %s0, 16, [#allocation5], [#allocation4]
  %12 = dma.done [#allocation4], 16
  %13 = sfence
  $region1: #{tpu_custom_call.1} parent=0
    #allocation6 [shape = 'u8[32768]{0}', space=vmem, size = 0x8000, scoped, tag = 'input window, operand 1']
    #allocation7 [shape = 's32[2]{0}', space=sflag, size = 0x8, scoped, tag = 'scoped memory for tpu_custom_call.1']
    #allocation8 [shape = 's32[2]{0}', space=sflag, size = 0x8, scoped, tag = 'scoped memory for tpu_custom_call.1']
    #allocation9 [shape = 'u8[8192]{0}', space=vmem, size = 0x2000, scoped, tag = 'output window, operand 0, single buffered']
    #allocation10 [shape = 'u8[512]{0}', space=vmem, size = 0x400, scoped, tag = 'output window, operand 1, single buffered']
    #allocation11 [shape = 's32[1]{0}', space=sflag, size = 0x4, scoped, tag = 'scoped memory for tpu_custom_call.1']
    %14 = vsyncpa [#allocation7], 0
    %s15 = scalar_lea.sflag [#allocation7], 1
    %16 = vsyncpa %s15, 0
    %17 = vsyncpa [#allocation8], 0
    %18 = vsyncpa [#allocation11], 0
    loop: start=0, step=1, limit=5
    $region2: #{tpu_custom_call.1} parent=1 // loop_pre_header
      _
    $region3: #{tpu_custom_call.1} parent=1 // loop_header
      %s20 = sphi 0, %s24
      %p21 = scmp.ge.s32.totalorder %s20, 5
      %s27 = sphi 0, %s46
      %s28 = sphi 0, %s42
      %s29 = sphi 0, %s38
      %s30 = sphi 0, %s27
      %s31 = sphi 0, %s28
      %s32 = sphi 0, %s29
      %s33 = sphi 0, %s30
      %s34 = sphi 0, %s31
      %s35 = sphi 0, %s32
      %s53 = sphi 0, %s55
      %s56 = sphi 0, %s53
      %s57 = sphi 0, %s56
      %s73 = sphi 0, %s57
      %s81 = sphi 0, %s83
      %s84 = sphi 0, %s81
      %s85 = sphi 0, %s84
      %s101 = sphi 0, %s85
      %s109 = sphi 0, %s111
      %s112 = sphi 0, %s109
      %s113 = sphi 0, %s112
      %s129 = sphi 0, %s113
      %s135 = sphi 0, %s137
      %s138 = sphi 0, %s135
      %s139 = sphi 0, %s138
      %s155 = sphi 0, %s139
    $region4: #{tpu_custom_call.1} parent=1 // loop_header_branch
      %23 = sbr.rel (%p21) target = $region8
    $region5: #{tpu_custom_call.1} parent=1 // loop_body
      %s25 = ssub.s32 %s20, 1
      %s26 = ssub.s32 %s20, 2
      %s36 = sadd.s32 1, %s29
      %p37 = scmp.ge.s32.totalorder %s36, 3
      %s38 = scalar_select %p37, 0, %s36
      %s39 = sadd.s32 1, %s28
      %s40 = scalar_select %p37, %s39, %s28
      %p41 = scmp.ge.s32.totalorder %s40, 1
      %s42 = scalar_select %p41, 0, %s40
      %s43 = sadd.s32 1, %s27
      %s44 = scalar_select %p41, %s43, %s27
      %p45 = scmp.ge.s32.totalorder %s44, 1
      %s46 = scalar_select %p45, 0, %s44
      %s47 = ssub.s32 %s29, %s38
      %s48 = ssub.s32 %s27, %s46
      %s49 = sor.u32 %s47, %s48
      %s50 = ssub.s32 %s28, %s42
      %s51 = sor.u32 %s49, %s50
      %p52 = scmp.eq.s32.totalorder %s51, 0
      %s54 = sadd.s32 %s53, 1
      %s55 = scalar_select %p52, %s53, %s54
      %p58 = pneg %p52
      %p59 = scmp.eq.s32.totalorder %s20, 2
      %p60 = por %p58, %p59
      %p61 = scmp.ne.s32.totalorder %s53, %s56
      %p62 = scmp.eq.s32.totalorder %s20, 0
      %p63 = por %p61, %p62
      %p64 = scmp.ne.s32.totalorder %s53, %s56
      %p65 = scmp.eq.s32.totalorder %s25, 2
      %p66 = por %p64, %p65
      %p67 = scmp.ne.s32.totalorder %s56, %s57
      %p68 = scmp.eq.s32.totalorder %s25, 0
      %p69 = por %p67, %p68
      %p70 = scmp.ne.s32.totalorder %s56, %s57
      %p71 = scmp.eq.s32.totalorder %s26, 2
      %p72 = por %p70, %p71
      %p74 = scmp.ne.s32.totalorder %s57, %s73
      %p75 = scmp.eq.s32.totalorder %s26, 0
      %p76 = por %p74, %p75
      %s77 = ssub.s32 %s29, %s38
      %s78 = ssub.s32 %s28, %s42
      %s79 = sor.u32 %s77, %s78
      %p80 = scmp.eq.s32.totalorder %s79, 0
      %s82 = sadd.s32 %s81, 1
      %s83 = scalar_select %p80, %s81, %s82
      %p86 = pneg %p80
      %p87 = scmp.eq.s32.totalorder %s20, 2
      %p88 = por %p86, %p87
      %p89 = scmp.ne.s32.totalorder %s81, %s84
      %p90 = scmp.eq.s32.totalorder %s20, 0
      %p91 = por %p89, %p90
      %p92 = scmp.ne.s32.totalorder %s81, %s84
      %p93 = scmp.eq.s32.totalorder %s25, 2
      %p94 = por %p92, %p93
      %p95 = scmp.ne.s32.totalorder %s84, %s85
      %p96 = scmp.eq.s32.totalorder %s25, 0
      %p97 = por %p95, %p96
      %p98 = scmp.ne.s32.totalorder %s84, %s85
      %p99 = scmp.eq.s32.totalorder %s26, 2
      %p100 = por %p98, %p99
      %p102 = scmp.ne.s32.totalorder %s85, %s101
      %p103 = scmp.eq.s32.totalorder %s26, 0
      %p104 = por %p102, %p103
      %s105 = ssub.s32 %s27, %s46
      %s106 = ssub.s32 %s28, %s42
      %s107 = sor.u32 %s105, %s106
      %p108 = scmp.eq.s32.totalorder %s107, 0
      %s110 = sadd.s32 %s109, 1
      %s111 = scalar_select %p108, %s109, %s110
      %p114 = pneg %p108
      %p115 = scmp.eq.s32.totalorder %s20, 2
      %p116 = por %p114, %p115
      %p117 = scmp.ne.s32.totalorder %s109, %s112
      %p118 = scmp.eq.s32.totalorder %s20, 0
      %p119 = por %p117, %p118
      %p120 = scmp.ne.s32.totalorder %s109, %s112
      %p121 = scmp.eq.s32.totalorder %s25, 2
      %p122 = por %p120, %p121
      %p123 = scmp.ne.s32.totalorder %s112, %s113
      %p124 = scmp.eq.s32.totalorder %s25, 0
      %p125 = por %p123, %p124
      %p126 = scmp.ne.s32.totalorder %s112, %s113
      %p127 = scmp.eq.s32.totalorder %s26, 2
      %p128 = por %p126, %p127
      %p130 = scmp.ne.s32.totalorder %s113, %s129
      %p131 = scmp.eq.s32.totalorder %s26, 0
      %p132 = por %p130, %p131
      %s133 = ssub.s32 %s28, %s42
      %p134 = scmp.eq.s32.totalorder %s133, 0
      %s136 = sadd.s32 %s135, 1
      %s137 = scalar_select %p134, %s135, %s136
      %p140 = pneg %p134
      %p141 = scmp.eq.s32.totalorder %s20, 2
      %p142 = por %p140, %p141
      %p143 = scmp.ne.s32.totalorder %s135, %s138
      %p144 = scmp.eq.s32.totalorder %s20, 0
      %p145 = por %p143, %p144
      %p146 = scmp.ne.s32.totalorder %s135, %s138
      %p147 = scmp.eq.s32.totalorder %s25, 2
      %p148 = por %p146, %p147
      %p149 = scmp.ne.s32.totalorder %s138, %s139
      %p150 = scmp.eq.s32.totalorder %s25, 0
      %p151 = por %p149, %p150
      %p152 = scmp.ne.s32.totalorder %s138, %s139
      %p153 = scmp.eq.s32.totalorder %s26, 2
      %p154 = por %p152, %p153
      %p156 = scmp.ne.s32.totalorder %s139, %s155
      %p157 = scmp.eq.s32.totalorder %s26, 0
      %p158 = por %p156, %p157
      %p159 = scmp.le.s32.totalorder 1, %s20
      %p160 = scmp.lt.s32.totalorder %s20, 4
      %p161 = pnand %p159, %p160
      %p162 = pneg %p161
      // Predicated region
      $region9: #{tpu_custom_call.1} parent=5 // pred_check
        _
      $region10: #{tpu_custom_call.1} parent=5 // pred_check_branch
        %164 = sbr.rel (%p161) target = $region12
      $region11: #{tpu_custom_call.1} parent=5 // pred_region
        %s165 = ssub.s32 %s20, 1
      $region12: #{tpu_custom_call.1} parent=5 // pred_fallthru
        _
      %p166 = scmp.lt.s32.totalorder %s20, 3
      // Predicated region
      $region13: #{tpu_custom_call.1} parent=5 // pred_check
        %p167 = pneg %p166
      $region14: #{tpu_custom_call.1} parent=5 // pred_check_branch
        %169 = sbr.rel (%p167) target = $region16
      $region15: #{tpu_custom_call.1} parent=5 // pred_region
        // Predicated region
        $region17: #{tpu_custom_call.1} parent=15 // pred_check
          %p170 = pneg %p63
        $region18: #{tpu_custom_call.1} parent=15 // pred_check_branch
          %172 = sbr.rel (%p170) target = $region20
        $region19: #{tpu_custom_call.1} parent=15 // pred_region
          %s173 = sand.u32 %s53, 1
          %s174 = scalar_lea.sflag [#allocation7], %s173
          %s175 = sand.u32 %s53, 1
          %s176 = smul.addr %s175, 32
          %s177 = scalar_lea.vmem [#allocation6], %s176
          %s178 = smul.u32 4, %s27
          %s180 = ssub.s32 512, 512
          %181 = vsyncadd %s174, %s180
          %s182 = sadd.s32 %s28, %s178
          %s183 = smul.addr %s29, 4
          %s184 = sadd.s32 %s182, %s183
          %s185 = smul.addr %s184, 128
          %s186 = scalar_lea.hbm %s1, %s185
          %s187 = sshll.u32 %s177, 4
          %s188 = int_to_ptr.vmem [resolvable:$true] %s187
          %193 = dma.hbm_to_vmem [thread:$0]  %s186, 512, %s188, %s174, 128, 128, 8
        $region20: #{tpu_custom_call.1} parent=15 // pred_fallthru
          _
        // Predicated region
        $region21: #{tpu_custom_call.1} parent=15 // pred_check
          %p194 = pneg %p91
        $region22: #{tpu_custom_call.1} parent=15 // pred_check_branch
          %196 = sbr.rel (%p194) target = $region24
        $region23: #{tpu_custom_call.1} parent=15 // pred_region
          %p197 = scmp.lt.s32.totalorder %s29, 2
          %s198 = scalar_select %p197, %s29, 2
          %p199 = scmp.lt.s32.totalorder %s28, 0
          %s200 = scalar_select %p199, %s28, 0
          %s201 = sadd.s32 %s200, %s198
          %s202 = scalar_lea.vmem %s2, %s201
        $region24: #{tpu_custom_call.1} parent=15 // pred_fallthru
          _
      $region16: #{tpu_custom_call.1} parent=5 // pred_fallthru
        _
      %p203 = scmp.le.s32.totalorder 1, %s20
      %p204 = scmp.lt.s32.totalorder %s20, 4
      %p205 = pnand %p203, %p204
      %p206 = pneg %p205
      // Predicated region
      $region25: #{tpu_custom_call.1} parent=5 // pred_check
        _
      $region26: #{tpu_custom_call.1} parent=5 // pred_check_branch
        %208 = sbr.rel (%p205) target = $region28
      $region27: #{tpu_custom_call.1} parent=5 // pred_region
        %s209 = ssub.s32 %s20, 1
        %s210 = sand.u32 %s56, 1
        %s211 = scalar_lea.sflag [#allocation7], %s210
        %s212 = sand.u32 %s56, 1
        %s213 = smul.addr %s212, 32
        %s214 = scalar_lea.vmem [#allocation6], %s213
        // Predicated region
        $region29: #{tpu_custom_call.1} parent=27 // pred_check
          %p215 = pneg %p69
        $region30: #{tpu_custom_call.1} parent=27 // pred_check_branch
          %217 = sbr.rel (%p215) target = $region32
        $region31: #{tpu_custom_call.1} parent=27 // pred_region
          %218 = dma.done %s211, 512
        $region32: #{tpu_custom_call.1} parent=27 // pred_fallthru
          _
        %s219 = sand.u32 %s56, 1
        %s220 = scalar_lea.sflag [#allocation7], %s219
        %s221 = sand.u32 %s56, 1
        %s222 = smul.addr %s221, 32
        %s223 = scalar_lea.vmem [#allocation6], %s222
        %p224 = pneg %p69
        %p225 = pneg %p66
        %p226 = scmp.lt.s32.totalorder %s32, 2
        %s227 = scalar_select %p226, %s32, 2
        %p228 = scmp.lt.s32.totalorder %s31, 0
        %s229 = scalar_select %p228, %s31, 0
        %s230 = sadd.s32 %s229, %s227
        %s231 = scalar_lea.vmem %s2, %s230
        %p232 = pneg %p97
        %p233 = pneg %p94
        %p234 = pneg %p125
        %p235 = pneg %p122
        %p236 = pneg %p151
        %p237 = pneg %p148
        %s238 = smul.u32 4, %s30
        %p239 = scmp.lt.s32.totalorder %s32, 2
        %s240 = scalar_select %p239, %s32, 2
        %p241 = scmp.lt.s32.totalorder %s31, 0
        %s242 = scalar_select %p241, %s31, 0
        %s243 = sadd.s32 %s242, %s240
        %s244 = scalar_lea.vmem %s2, %s243
        %s245 = smul.u32 4, %s30
        %p246 = scmp.eq.s32.totalorder %s32, 0
        // Predicated region
        $region33: #{tpu_custom_call.1} parent=27 // pred_check
          %p247 = pneg %p246
        $region34: #{tpu_custom_call.1} parent=27 // pred_check_branch
          %249 = sbr.rel (%p247) target = $region36
        $region35: #{tpu_custom_call.1} parent=27 // pred_region
          %250 = vst [vmem:[#allocation2] sm:$0xff] 0.0
          %251 = vst [vmem:[#allocation2 + $0x8] sm:$0xff] 0.0
          %252 = vst [vmem:[#allocation2 + $0x10] sm:$0xff] 0.0
          %253 = vst [vmem:[#allocation2 + $0x18] sm:$0xff] 0.0
          %254 = vst [vmem:[#allocation3] sm:$0x1] 0.0
        $region36: #{tpu_custom_call.1} parent=27 // pred_fallthru
          _
        %s255 = sld [smem:[#allocation5 + %s32]]
        %v256 = vld [vmem:[#allocation2] sm:$0xff]
        %v257 = vld [vmem:[#allocation2 + $0x8] sm:$0xff]
        %v258 = vld [vmem:[#allocation2 + $0x10] sm:$0xff]
        %v259 = vld [vmem:[#allocation2 + $0x18] sm:$0xff]
        %v260 = vld [vmem:[%s214] sm:$0xff]
        %v261 = vld [vmem:[%s214 + $0x8] sm:$0xff]
        %v262 = vld [vmem:[%s214 + $0x10] sm:$0xff]
        %v263 = vld [vmem:[%s214 + $0x18] sm:$0xff]
        %v264 = vstv %s255
        %v265 = vmul.f32 %v264, %v260
        %v266 = vmul.f32 %v264, %v261
        %v267 = vmul.f32 %v264, %v262
        %v268 = vmul.f32 %v264, %v263
        %v269 = vadd.f32 %v256, %v265
        %v270 = vadd.f32 %v257, %v266
        %v271 = vadd.f32 %v258, %v267
        %v272 = vadd.f32 %v259, %v268
        %273 = vst [vmem:[#allocation2] sm:$0xff] %v269
        %274 = vst [vmem:[#allocation2 + $0x8] sm:$0xff] %v270
        %275 = vst [vmem:[#allocation2 + $0x10] sm:$0xff] %v271
        %276 = vst [vmem:[#allocation2 + $0x18] sm:$0xff] %v272
        %v277 = vld [vmem:[#allocation3] sm:$0x1]
        %v278 = vld [vmem:[%s244] sm:$0x1]
        %v279 = vmul.f32 %v264, %v278
        %v280 = vadd.f32 %v277, %v279
        %281 = vst [vmem:[#allocation3] sm:$0x1] %v280
        %p282 = scmp.eq.s32.totalorder %s32, 2
        // Predicated region
        $region37: #{tpu_custom_call.1} parent=27 // pred_check
          %p283 = pneg %p282
        $region38: #{tpu_custom_call.1} parent=27 // pred_check_branch
          %285 = sbr.rel (%p283) target = $region40
        $region39: #{tpu_custom_call.1} parent=27 // pred_region
          %v286 = vld [vmem:[#allocation2] sm:$0xff]
          %v287 = vld [vmem:[#allocation2 + $0x8] sm:$0xff]
          %v288 = vld [vmem:[#allocation2 + $0x10] sm:$0xff]
          %v289 = vld [vmem:[#allocation2 + $0x18] sm:$0xff]
          %v290 = vpack.c.bf16 %v287, %v286
          %v291 = vpack.c.bf16 %v289, %v288
          %v294 = vunpack.c.l.b16 %v290
          %v295 = vunpack.c.h.b16 %v290
          %v296 = vunpack.c.l.b16 %v291
          %v297 = vunpack.c.h.b16 %v291
          %v298 = vpack.c.b16 %v294, %v294
          %v299 = vpack.c.b16 %v295, %v295
          %v300 = vpack.c.b16 %v296, %v296
          %v301 = vpack.c.b16 %v297, %v297
          %306 = vst [vmem:[#allocation9] sm:$0xf] %v298
          %307 = vst [vmem:[#allocation9 + $0x4] sm:$0xf] %v299
          %308 = vst [vmem:[#allocation9 + $0x8] sm:$0xf] %v300
          %309 = vst [vmem:[#allocation9 + $0xc] sm:$0xf] %v301
          %v310 = vld [vmem:[#allocation3] sm:$0x1]
          %v311 = vpack.c.bf16 %v310, %v310
          %vm312 = vcmask 1040384
          %vm313 = vsmask.f32 256
          %vm314 = vmand %vm312, %vm313
          %v315 = vld [vmem:[#allocation10] sm:$0x1]
          %v316 = vsel %vm314, %v311, %v315
          %317 = vst [vmem:[#allocation10] sm:$0x1] %v316
        $region40: #{tpu_custom_call.1} parent=27 // pred_fallthru
          _
        // Predicated region
        $region41: #{tpu_custom_call.1} parent=27 // pred_check
          %p318 = pneg %p122
        $region42: #{tpu_custom_call.1} parent=27 // pred_check_branch
          %320 = sbr.rel (%p318) target = $region44
        $region43: #{tpu_custom_call.1} parent=27 // pred_region
          %s321 = smul.u32 4, %s30
          %s323 = ssub.s32 256, 256
          %324 = vsyncadd [#allocation8], %s323
          %s325 = sadd.s32 %s31, %s321
          %s326 = smul.addr %s325, 64
          %s327 = scalar_lea.hbm %s3, %s326
          %s328 = sshll.u32 [#allocation9], 4
          %s329 = int_to_ptr.vmem [resolvable:$true] %s328
          %334 = dma.vmem_to_hbm [thread:$0]  %s329, 256, %s327, [#allocation8], 64, 64, 4
        $region44: #{tpu_custom_call.1} parent=27 // pred_fallthru
          _
        // Predicated region
        $region45: #{tpu_custom_call.1} parent=27 // pred_check
          %p335 = pneg %p148
        $region46: #{tpu_custom_call.1} parent=27 // pred_check_branch
          %337 = sbr.rel (%p335) target = $region48
        $region47: #{tpu_custom_call.1} parent=27 // pred_region
          %s339 = ssub.s32 16, 16
          %340 = vsyncadd [#allocation11], %s339
          %s341 = smul.addr %s31, 16
          %s342 = scalar_lea.hbm %s4, %s341
          %s344 = sshll.u32 [#allocation10], 4
          %s345 = int_to_ptr.vmem [resolvable:$true] %s344
          %347 = dma.vmem_to_hbm [thread:$0]  %s345, 16, %s342, [#allocation11]
        $region48: #{tpu_custom_call.1} parent=27 // pred_fallthru
          _
        // Predicated region
        $region49: #{tpu_custom_call.1} parent=27 // pred_check
          %p348 = pneg %p122
        $region50: #{tpu_custom_call.1} parent=27 // pred_check_branch
          %350 = sbr.rel (%p348) target = $region52
        $region51: #{tpu_custom_call.1} parent=27 // pred_region
          %351 = dma.done [#allocation8], 256
        $region52: #{tpu_custom_call.1} parent=27 // pred_fallthru
          _
        // Predicated region
        $region53: #{tpu_custom_call.1} parent=27 // pred_check
          %p352 = pneg %p148
        $region54: #{tpu_custom_call.1} parent=27 // pred_check_branch
          %354 = sbr.rel (%p352) target = $region56
        $region55: #{tpu_custom_call.1} parent=27 // pred_region
          %355 = dma.done [#allocation11], 16
        $region56: #{tpu_custom_call.1} parent=27 // pred_fallthru
          _
      $region28: #{tpu_custom_call.1} parent=5 // pred_fallthru
        _
      %p356 = scmp.le.s32.totalorder 2, %s20
      // Predicated region
      $region57: #{tpu_custom_call.1} parent=5 // pred_check
        %p357 = pneg %p356
      $region58: #{tpu_custom_call.1} parent=5 // pred_check_branch
        %359 = sbr.rel (%p357) target = $region60
      $region59: #{tpu_custom_call.1} parent=5 // pred_region
        %s360 = ssub.s32 %s20, 2
      $region60: #{tpu_custom_call.1} parent=5 // pred_fallthru
        _
    $region6: #{tpu_custom_call.1} parent=1 // loop_footer
      %s24 = sadd.s32 1, %s20
    $region7: #{tpu_custom_call.1} parent=1 // loop_footer_branch
      %19 = sbr.rel target = $region3
    $region8: #{tpu_custom_call.1} parent=1 // loop_exit
      _
    %361 = vsyncpa [#allocation7], 1
    %s362 = scalar_lea.sflag [#allocation7], 1
    %363 = vsyncpa %s362, 1
    %364 = vsyncpa [#allocation8], 1
    %s365 = scalar_lea.sflag [#allocation8], 1
    %366 = vsyncpa %s365, 1
    %367 = vsyncpa [#allocation11], 1

</llo_original>
